<compile_context>
chip_gen: v7x
topology: tpu7x:2x2x1
jax: 0.10.0
libtpu: 0.0.40
codegen_flags: <defaults>
</compile_context>

<pallas_src>
import math

import jax
import jax.numpy as jnp
from jax.experimental import pallas as pl
from jax.experimental.pallas import tpu as pltpu

_LANE = 128
_SUBLANE = 8
_TARGET_BLOCK_ROWS = 4096        # 2 MiB per input tile (f32)
_CHUNK_ROWS = 512                # in-kernel compute chunk (bounds temporaries)
_VMEM_LIMIT_BYTES = 64 * 1024 * 1024


def _round_up(x: int, m: int) -> int:
    return (x + m - 1) // m * m


def _num_tensorcores() -> int:
    """Best-effort TensorCore count for the current device (v7x has 2)."""
    try:
        info = pltpu.get_tpu_info()
    except Exception:
        return 1
    for name in ("num_cores", "core_count", "num_tensorcores",
                 "tensorcore_count", "cores_per_chip"):
        v = getattr(info, name, None)
        if isinstance(v, int) and 1 <= v <= 8:
            return v
    return 1


def _min_sublane(dtype) -> int:
    # Min second-to-last block dim per dtype: f32 -> 8, bf16 -> 16, 8-bit -> 32.
    bits = jnp.dtype(dtype).itemsize * 8
    return max(_SUBLANE, 256 // bits)


def _make_kernel(total_rows, block_rows, chunk_rows, steps, needs_mask):
    num_chunks = block_rows // chunk_rows

    def kernel(a_ref, b_ref, ao_ref, bo_ref, out_ref):
        p = pl.program_id(0)
        k = pl.program_id(1)

        @pl.when(k == 0)
        def _():
            out_ref[...] = jnp.zeros_like(out_ref)

        blk = p * steps + k                    # global block index (unclamped)
        block_row0 = blk * block_rows
        if needs_mask:
            row_iota = jax.lax.broadcasted_iota(
                jnp.int32, (chunk_rows, _LANE), 0)

        def chunk(c, carry):
            start = pl.multiple_of(c * chunk_rows, chunk_rows)
            a = a_ref[pl.ds(start, chunk_rows), :].astype(jnp.float32)
            b = b_ref[pl.ds(start, chunk_rows), :].astype(jnp.float32)
            ao = ao_ref[pl.ds(start, chunk_rows), :].astype(jnp.float32)
            bo = bo_ref[pl.ds(start, chunk_rows), :].astype(jnp.float32)
            d_ori = ao - bo
            d = a - b
            cal = jnp.exp(-(d_ori * d_ori)) * (d * d)          # decay = 1
            if needs_mask:
                # Zero rows at/after total_rows (ragged last block and any
                # grid block rounded up past the data).
                valid = (block_row0 + start + row_iota) < total_rows
                cal = jnp.where(valid, cal, 0.0)
            # Layout-preserving sublane split + pure-VPU adds onto the
            # resident (8, 128) output block.
            out_ref[...] += jnp.sum(
                cal.reshape(chunk_rows // _SUBLANE, _SUBLANE, _LANE), axis=0)
            return carry

        jax.lax.fori_loop(0, num_chunks, chunk, 0, unroll=True)

    return kernel


def frobenius_loss_decay(a, b, a_ori, b_ori):
    assert a.shape == b.shape == a_ori.shape == b_ori.shape
    assert a.ndim == 4, "FrobeniusLoss_decay expects (N, C, H, W)"
    n_batch = a.shape[0]
    total = math.prod(a.shape)

    sub_mult = max(_min_sublane(x.dtype) for x in (a, b, a_ori, b_ori))

    # Only pad when the element count is not a multiple of 128 (rare); zeros
    # contribute exactly 0 to the sum (exp(0) * 0).
    rem = total % _LANE
    pad_elems = 0 if rem == 0 else _LANE - rem
    total_rows = (total + pad_elems) // _LANE

    if total_rows <= _TARGET_BLOCK_ROWS:
        # Whole problem is one small block; pad it to a valid sublane multiple
        # (cheap at this size) so the block equals the (padded) array.
        n_par, steps = 1, 1
        block_rows = _round_up(max(total_rows, sub_mult), sub_mult)
        if block_rows != total_rows:
            pad_elems += (block_rows - total_rows) * _LANE
            total_rows = block_rows
        chunk_rows = block_rows
        real_blocks = 1
    else:
        n_par = _num_tensorcores()
        block_rows = _TARGET_BLOCK_ROWS          # multiple of _CHUNK_ROWS & 32
        chunk_rows = _CHUNK_ROWS
        real_blocks = pl.cdiv(total_rows, block_rows)
        num_blocks = _round_up(real_blocks, n_par)
        steps = num_blocks // n_par

    padded_rows = n_par * steps * block_rows
    needs_mask = padded_rows != total_rows

    def prep(x):
        flat = x.reshape(-1)
        if pad_elems:
            # Rare path (sub-128 remainder or tiny input): small zero pad.
            flat = jnp.pad(flat, (0, pad_elems))
        return flat.reshape(total_rows, _LANE)   # free reshape in common case

    a2, b2, ao2, bo2 = prep(a), prep(b), prep(a_ori), prep(b_ori)

    def in_index(p, k):
        # Clamp so grid blocks that lie entirely past the data (grid rounded
        # up to n_par) re-read the last real block; the in-kernel mask zeroes
        # their contribution.
        return (jnp.minimum(p * steps + k, real_blocks - 1), 0)

    in_spec = pl.BlockSpec((block_rows, _LANE), in_index)
    out_spec = pl.BlockSpec((None, _SUBLANE, _LANE), lambda p, k: (p, 0, 0))

    bytes_in = sum(x.size * x.dtype.itemsize for x in (a2, b2, ao2, bo2))
    cost = pl.CostEstimate(
        flops=7 * total_rows * _LANE,
        transcendentals=total_rows * _LANE,
        bytes_accessed=bytes_in + n_par * _SUBLANE * _LANE * 4,
    )

    partials = pl.pallas_call(
        _make_kernel(total_rows, block_rows, chunk_rows, steps, needs_mask),
        out_shape=jax.ShapeDtypeStruct((n_par, _SUBLANE, _LANE), jnp.float32),
        grid_spec=pltpu.PrefetchScalarGridSpec(
            num_scalar_prefetch=0,
            grid=(n_par, steps),
            in_specs=[in_spec, in_spec, in_spec, in_spec],
            out_specs=out_spec,
        ),
        compiler_params=pltpu.CompilerParams(
            dimension_semantics=("parallel", "arbitrary"),
            vmem_limit_bytes=_VMEM_LIMIT_BYTES,
        ),
        cost_estimate=cost,
    )(a2, b2, ao2, bo2)

    # Single horizontal reduce + batch mean in the wrapper.
    return jnp.sum(partials) / jnp.float32(n_batch)


def _reference(a, b, a_ori, b_ori):
    cal = jnp.exp(-jnp.abs(a_ori - b_ori) ** 2) * jnp.abs(a - b) ** 2
    loss = jnp.sum(cal, axis=(1, 2, 3))
    return jnp.mean(loss)


if __name__ == "__main__":
    key = jax.random.PRNGKey(0)
    keys = jax.random.split(key, 8)

    # Small shape consistent with the module (N, C, H, W).
    shape = (2, 4, 16, 16)
    a = jax.random.normal(keys[0], shape, dtype=jnp.float32)
    b = jax.random.normal(keys[1], shape, dtype=jnp.float32)
    a_ori = jax.random.normal(keys[2], shape, dtype=jnp.float32)
    b_ori = jax.random.normal(keys[3], shape, dtype=jnp.float32)

    out = jax.block_until_ready(frobenius_loss_decay(a, b, a_ori, b_ori))
    ref = _reference(a, b, a_ori, b_ori)
    assert jnp.allclose(out, ref, rtol=1e-5, atol=1e-5), (out, ref)

    # Also exercise the multi-block path (chunked compute + ragged-block mask).
    shape2 = (2, 16, 160, 160)   # 819200 elems -> 6400 rows > one 4096-row block
    a2 = jax.random.normal(keys[4], shape2, dtype=jnp.float32)
    b2 = jax.random.normal(keys[5], shape2, dtype=jnp.float32)
    a2_ori = jax.random.normal(keys[6], shape2, dtype=jnp.float32)
    b2_ori = jax.random.normal(keys[7], shape2, dtype=jnp.float32)

    out2 = jax.block_until_ready(frobenius_loss_decay(a2, b2, a2_ori, b2_ori))
    ref2 = _reference(a2, b2, a2_ori, b2_ori)
    assert jnp.allclose(out2, ref2, rtol=1e-4, atol=1e-3), (out2, ref2)

    print("KERNEL_OK")
</pallas_src>

<mosaic_0001>
module attributes {stable_mosaic.version = 11 : i64} {
  func.func @kernel(%arg0: i32, %arg1: i32, %arg2: memref<16x128xf32, #tpu.memory_space<vmem>>, %arg3: memref<16x128xf32, #tpu.memory_space<vmem>>, %arg4: memref<16x128xf32, #tpu.memory_space<vmem>>, %arg5: memref<16x128xf32, #tpu.memory_space<vmem>>, %arg6: memref<1x8x128xf32, #tpu.memory_space<vmem>>) attributes {dimension_semantics = [#tpu.dimension_semantics<parallel>, #tpu.dimension_semantics<arbitrary>], iteration_bounds = array<i64: 1, 1>, scalar_prefetch = 0 : i64, scratch_operands = 0 : i64, tpu.core_type = #tpu.core_type<tc>, window_params = [{transform_indices = @transform_0, window_bounds = array<i64: 16, 128>}, {transform_indices = @transform_1, window_bounds = array<i64: 16, 128>}, {transform_indices = @transform_2, window_bounds = array<i64: 16, 128>}, {transform_indices = @transform_3, window_bounds = array<i64: 16, 128>}, {transform_indices = @transform_4, window_bounds = array<i64: 1, 8, 128>}]} {
    %c0_i32 = arith.constant 0 : i32
    %0 = arith.cmpi eq, %arg1, %c0_i32 : i32
    %1 = arith.extui %0 : i1 to i32
    %c0_i32_0 = arith.constant 0 : i32
    %2 = arith.cmpi ne, %1, %c0_i32_0 : i32
    scf.if %2 {
      %cst_12 = arith.constant 0.000000e+00 : f32
      %29 = vector.broadcast %cst_12 : f32 to vector<8x128xf32>
      %c0_13 = arith.constant 0 : index
      %c0_14 = arith.constant 0 : index
      %c0_15 = arith.constant 0 : index
      %30 = vector.load %arg6[%c0_13, %c0_14, %c0_15] : memref<1x8x128xf32, #tpu.memory_space<vmem>>, vector<1x8x128xf32>
      %31 = vector.shape_cast %30 : vector<1x8x128xf32> to vector<8x128xf32>
      %32 = vector.shape_cast %29 : vector<8x128xf32> to vector<1x8x128xf32>
      tpu.vector_store %arg6[%c0_13, %c0_14, %c0_15], %32 {strides = array<i32>} : memref<1x8x128xf32, #tpu.memory_space<vmem>>, vector<1x8x128xf32>,
    } else {
    }
    %c0_i32_1 = arith.constant 0 : i32
    %c16_i32 = arith.constant 16 : i32
    %3 = arith.muli %c0_i32_1, %c16_i32 : i32
    %4 = tpu.assume_multiple %3, 16 : i32
    %5 = arith.index_cast %4 : i32 to index
    %c0 = arith.constant 0 : index
    %6 = vector.load %arg2[%5, %c0] : memref<16x128xf32, #tpu.memory_space<vmem>>, vector<16x128xf32>
    %7 = arith.index_cast %4 : i32 to index
    %c0_2 = arith.constant 0 : index
    %8 = vector.load %arg3[%7, %c0_2] : memref<16x128xf32, #tpu.memory_space<vmem>>, vector<16x128xf32>
    %9 = arith.index_cast %4 : i32 to index
    %c0_3 = arith.constant 0 : index
    %10 = vector.load %arg4[%9, %c0_3] : memref<16x128xf32, #tpu.memory_space<vmem>>, vector<16x128xf32>
    %11 = arith.index_cast %4 : i32 to index
    %c0_4 = arith.constant 0 : index
    %12 = vector.load %arg5[%11, %c0_4] : memref<16x128xf32, #tpu.memory_space<vmem>>, vector<16x128xf32>
    %13 = arith.subf %10, %12 : vector<16x128xf32>
    %14 = arith.subf %6, %8 : vector<16x128xf32>
    %15 = arith.mulf %13, %13 : vector<16x128xf32>
    %cst = arith.constant 0.000000e+00 : f32
    %16 = vector.broadcast %cst : f32 to vector<16x128xf32>
    %17 = arith.subf %16, %15 : vector<16x128xf32>
    %18 = math.exp %17 : vector<16x128xf32>
    %19 = arith.mulf %14, %14 : vector<16x128xf32>
    %20 = arith.mulf %18, %19 : vector<16x128xf32>
    %c0_5 = arith.constant 0 : index
    %c0_6 = arith.constant 0 : index
    %c0_7 = arith.constant 0 : index
    %21 = vector.load %arg6[%c0_5, %c0_6, %c0_7] : memref<1x8x128xf32, #tpu.memory_space<vmem>>, vector<1x8x128xf32>
    %22 = vector.shape_cast %21 : vector<1x8x128xf32> to vector<8x128xf32>
    %23 = vector.shape_cast %20 : vector<16x128xf32> to vector<2x8x128xf32>
    %cst_8 = arith.constant dense<0.000000e+00> : vector<8x128xf32>
    %24 = vector.multi_reduction <add>, %23, %cst_8 [0] : vector<2x8x128xf32> to vector<8x128xf32>
    %25 = arith.addf %22, %24 : vector<8x128xf32>
    %c0_9 = arith.constant 0 : index
    %c0_10 = arith.constant 0 : index
    %c0_11 = arith.constant 0 : index
    %26 = vector.load %arg6[%c0_9, %c0_10, %c0_11] : memref<1x8x128xf32, #tpu.memory_space<vmem>>, vector<1x8x128xf32>
    %27 = vector.shape_cast %26 : vector<1x8x128xf32> to vector<8x128xf32>
    %28 = vector.shape_cast %25 : vector<8x128xf32> to vector<1x8x128xf32>
    tpu.vector_store %arg6[%c0_9, %c0_10, %c0_11], %28 {strides = array<i32>} : memref<1x8x128xf32, #tpu.memory_space<vmem>>, vector<1x8x128xf32>,
    %c1_i32 = arith.constant 1 : i32
    return
  }
  func.func @transform_0(%arg0: i32, %arg1: i32) -> (i32, i32) {
    %c1_i32 = arith.constant 1 : i32
    %0 = arith.muli %arg0, %c1_i32 : i32
    %1 = arith.addi %0, %arg1 : i32
    %c0_i32 = arith.constant 0 : i32
    %2 = arith.minsi %1, %c0_i32 : i32
    %c0_i32_0 = arith.constant 0 : i32
    %c0_i32_1 = arith.constant 0 : i32
    return %2, %c0_i32_0 : i32, i32
  }
  func.func @transform_1(%arg0: i32, %arg1: i32) -> (i32, i32) {
    %c1_i32 = arith.constant 1 : i32
    %0 = arith.muli %arg0, %c1_i32 : i32
    %1 = arith.addi %0, %arg1 : i32
    %c0_i32 = arith.constant 0 : i32
    %2 = arith.minsi %1, %c0_i32 : i32
    %c0_i32_0 = arith.constant 0 : i32
    %c0_i32_1 = arith.constant 0 : i32
    return %2, %c0_i32_0 : i32, i32
  }
  func.func @transform_2(%arg0: i32, %arg1: i32) -> (i32, i32) {
    %c1_i32 = arith.constant 1 : i32
    %0 = arith.muli %arg0, %c1_i32 : i32
    %1 = arith.addi %0, %arg1 : i32
    %c0_i32 = arith.constant 0 : i32
    %2 = arith.minsi %1, %c0_i32 : i32
    %c0_i32_0 = arith.constant 0 : i32
    %c0_i32_1 = arith.constant 0 : i32
    return %2, %c0_i32_0 : i32, i32
  }
  func.func @transform_3(%arg0: i32, %arg1: i32) -> (i32, i32) {
    %c1_i32 = arith.constant 1 : i32
    %0 = arith.muli %arg0, %c1_i32 : i32
    %1 = arith.addi %0, %arg1 : i32
    %c0_i32 = arith.constant 0 : i32
    %2 = arith.minsi %1, %c0_i32 : i32
    %c0_i32_0 = arith.constant 0 : i32
    %c0_i32_1 = arith.constant 0 : i32
    return %2, %c0_i32_0 : i32, i32
  }
  func.func @transform_4(%arg0: i32, %arg1: i32) -> (i32, i32, i32) {
    %c0_i32 = arith.constant 0 : i32
    %c0_i32_0 = arith.constant 0 : i32
    %c0_i32_1 = arith.constant 0 : i32
    return %arg0, %c0_i32, %c0_i32_0 : i32, i32, i32
  }
}

</mosaic_0001>

<llo_original>
// kernel: tpu_custom_call.1
$region0: #{tpu_custom_call.1}
  #allocation0 [shape = 'u32[]', space=smem, size = 0x4, offset = 0x4, fixed_abs, tag = 'smem constant byte address 0x4 - core index']
  #allocation1 [shape = 'u32[144,128]{1,0:T(1,128)}', space=vmem, size = 0x12000, scoped, tag = 'internal scratch']
  %s0 = inlined_call_operand.hbm [shape: f32[16,128], index: 0, kind: input, shape index: {}]
  %s1 = inlined_call_operand.hbm [shape: f32[16,128], index: 1, kind: input, shape index: {}]
  %s2 = inlined_call_operand.hbm [shape: f32[16,128], index: 2, kind: input, shape index: {}]
  %s3 = inlined_call_operand.hbm [shape: f32[16,128], index: 3, kind: input, shape index: {}]
  %s4 = inlined_call_operand.hbm [shape: f32[1,8,128], index: 4, kind: output, shape index: {}]
  %s5 = sld [smem:[#allocation0]]
  $region46: #{tpu_custom_call.1} parent=0
    _
  %s7 = ssub.s32 1, %s5
  %s8 = scalar_select 0, %s7, %s5
  $region1: #{tpu_custom_call.1} parent=0
    #allocation2 [shape = 'u8[8192]{0}', space=vmem, size = 0x2000, scoped, tag = 'input window, operand 0, single buffered']
    #allocation3 [shape = 's32[1]{0}', space=sflag, size = 0x4, scoped, tag = 'scoped memory for tpu_custom_call.1']
    #allocation4 [shape = 's32[1]{0}', space=sflag, size = 0x4, scoped, tag = 'scoped memory for tpu_custom_call.1']
    #allocation5 [shape = 'u8[8192]{0}', space=vmem, size = 0x2000, scoped, tag = 'input window, operand 1, single buffered']
    #allocation6 [shape = 's32[1]{0}', space=sflag, size = 0x4, scoped, tag = 'scoped memory for tpu_custom_call.1']
    #allocation7 [shape = 'u8[8192]{0}', space=vmem, size = 0x2000, scoped, tag = 'input window, operand 2, single buffered']
    #allocation8 [shape = 'u8[8192]{0}', space=vmem, size = 0x2000, scoped, tag = 'input window, operand 3, single buffered']
    #allocation9 [shape = 's32[1]{0}', space=sflag, size = 0x4, scoped, tag = 'scoped memory for tpu_custom_call.1']
    #allocation10 [shape = 'u8[4096]{0}', space=vmem, size = 0x1000, scoped, tag = 'output window, operand 0, single buffered']
    %9 = vsyncpa [#allocation3], 0
    %10 = vsyncpa [#allocation6], 0
    %11 = vsyncpa [#allocation9], 0
    %12 = vsyncpa [#allocation4], 0
    // Predicated region
    $region2: #{tpu_custom_call.1} parent=1 // pred_check
      _
    $region3: #{tpu_custom_call.1} parent=1 // pred_check_branch
      %14 = sbr.rel (0) target = $region5
    $region4: #{tpu_custom_call.1} parent=1 // pred_region
      %s15 = sadd.s32 0, 0
      %p16 = scmp.lt.s32.totalorder %s15, 0
      %s17 = scalar_select %p16, %s15, 0
      %s18 = smul.u32 2, %s17
      %s20 = ssub.s32 256, 256
      %21 = vsyncadd [#allocation3], %s20
      %s22 = smul.addr %s18, 128
      %s23 = scalar_lea.hbm %s0, %s22
      %s24 = sshll.u32 [#allocation2], 4
      %s25 = int_to_ptr.vmem [resolvable:$true] %s24
      %30 = dma.hbm_to_vmem [thread:$0]  %s23, 256, %s25, [#allocation3], 128, 128, 8
    $region5: #{tpu_custom_call.1} parent=1 // pred_fallthru
      _
    // Predicated region
    $region6: #{tpu_custom_call.1} parent=1 // pred_check
      _
    $region7: #{tpu_custom_call.1} parent=1 // pred_check_branch
      %32 = sbr.rel (0) target = $region9
    $region8: #{tpu_custom_call.1} parent=1 // pred_region
      %s33 = sadd.s32 0, 0
      %p34 = scmp.lt.s32.totalorder %s33, 0
      %s35 = scalar_select %p34, %s33, 0
      %s36 = smul.u32 2, %s35
      %s38 = ssub.s32 256, 256
      %39 = vsyncadd [#allocation6], %s38
      %s40 = smul.addr %s36, 128
      %s41 = scalar_lea.hbm %s1, %s40
      %s42 = sshll.u32 [#allocation5], 4
      %s43 = int_to_ptr.vmem [resolvable:$true] %s42
      %48 = dma.hbm_to_vmem [thread:$0]  %s41, 256, %s43, [#allocation6], 128, 128, 8
    $region9: #{tpu_custom_call.1} parent=1 // pred_fallthru
      _
    // Predicated region
    $region10: #{tpu_custom_call.1} parent=1 // pred_check
      _
    $region11: #{tpu_custom_call.1} parent=1 // pred_check_branch
      %50 = sbr.rel (0) target = $region13
    $region12: #{tpu_custom_call.1} parent=1 // pred_region
      %s51 = sadd.s32 0, 0
      %p52 = scmp.lt.s32.totalorder %s51, 0
      %s53 = scalar_select %p52, %s51, 0
      %s54 = smul.u32 2, %s53
      %s56 = ssub.s32 256, 256
      %57 = vsyncadd [#allocation6], %s56
      %s58 = smul.addr %s54, 128
      %s59 = scalar_lea.hbm %s2, %s58
      %s60 = sshll.u32 [#allocation7], 4
      %s61 = int_to_ptr.vmem [resolvable:$true] %s60
      %66 = dma.hbm_to_vmem [thread:$0]  %s59, 256, %s61, [#allocation6], 128, 128, 8
    $region13: #{tpu_custom_call.1} parent=1 // pred_fallthru
      _
    // Predicated region
    $region14: #{tpu_custom_call.1} parent=1 // pred_check
      _
    $region15: #{tpu_custom_call.1} parent=1 // pred_check_branch
      %68 = sbr.rel (0) target = $region17
    $region16: #{tpu_custom_call.1} parent=1 // pred_region
      %s69 = sadd.s32 0, 0
      %p70 = scmp.lt.s32.totalorder %s69, 0
      %s71 = scalar_select %p70, %s69, 0
      %s72 = smul.u32 2, %s71
      %s74 = ssub.s32 256, 256
      %75 = vsyncadd [#allocation9], %s74
      %s76 = smul.addr %s72, 128
      %s77 = scalar_lea.hbm %s3, %s76
      %s78 = sshll.u32 [#allocation8], 4
      %s79 = int_to_ptr.vmem [resolvable:$true] %s78
      %84 = dma.hbm_to_vmem [thread:$0]  %s77, 256, %s79, [#allocation9], 128, 128, 8
    $region17: #{tpu_custom_call.1} parent=1 // pred_fallthru
      _
    // Predicated region
    $region18: #{tpu_custom_call.1} parent=1 // pred_check
      _
    $region19: #{tpu_custom_call.1} parent=1 // pred_check_branch
      %86 = sbr.rel (0) target = $region21
    $region20: #{tpu_custom_call.1} parent=1 // pred_region
      %87 = dma.done [#allocation3], 256
    $region21: #{tpu_custom_call.1} parent=1 // pred_fallthru
      _
    // Predicated region
    $region22: #{tpu_custom_call.1} parent=1 // pred_check
      _
    $region23: #{tpu_custom_call.1} parent=1 // pred_check_branch
      %89 = sbr.rel (0) target = $region25
    $region24: #{tpu_custom_call.1} parent=1 // pred_region
      %90 = dma.done [#allocation6], 256
    $region25: #{tpu_custom_call.1} parent=1 // pred_fallthru
      _
    // Predicated region
    $region26: #{tpu_custom_call.1} parent=1 // pred_check
      _
    $region27: #{tpu_custom_call.1} parent=1 // pred_check_branch
      %92 = sbr.rel (0) target = $region29
    $region28: #{tpu_custom_call.1} parent=1 // pred_region
      %93 = dma.done [#allocation6], 256
    $region29: #{tpu_custom_call.1} parent=1 // pred_fallthru
      _
    // Predicated region
    $region30: #{tpu_custom_call.1} parent=1 // pred_check
      _
    $region31: #{tpu_custom_call.1} parent=1 // pred_check_branch
      %95 = sbr.rel (0) target = $region33
    $region32: #{tpu_custom_call.1} parent=1 // pred_region
      %96 = dma.done [#allocation9], 256
    $region33: #{tpu_custom_call.1} parent=1 // pred_fallthru
      _
    %s97 = sadd.s32 0, 0
    %p98 = scmp.lt.s32.totalorder %s97, 0
    %s99 = scalar_select %p98, %s97, 0
    %s100 = smul.u32 2, %s99
    %s101 = sadd.s32 0, 0
    %p102 = scmp.lt.s32.totalorder %s101, 0
    %s103 = scalar_select %p102, %s101, 0
    %s104 = smul.u32 2, %s103
    %s105 = sadd.s32 0, 0
    %p106 = scmp.lt.s32.totalorder %s105, 0
    %s107 = scalar_select %p106, %s105, 0
    %s108 = smul.u32 2, %s107
    %s109 = sadd.s32 0, 0
    %p110 = scmp.lt.s32.totalorder %s109, 0
    %s111 = scalar_select %p110, %s109, 0
    %s112 = smul.u32 2, %s111
    %p113 = scmp.eq.s32.totalorder 0, 0
    // Predicated region
    $region34: #{tpu_custom_call.1} parent=1 // pred_check
      %p114 = pneg %p113
    $region35: #{tpu_custom_call.1} parent=1 // pred_check_branch
      %116 = sbr.rel (%p114) target = $region37
    $region36: #{tpu_custom_call.1} parent=1 // pred_region
      %117 = vst [vmem:[#allocation10] sm:$0xff] 0.0
    $region37: #{tpu_custom_call.1} parent=1 // pred_fallthru
      _
    %v118 = vld [vmem:[#allocation2] sm:$0xff]
    %v119 = vld [vmem:[#allocation2 + $0x8] sm:$0xff]
    %v120 = vld [vmem:[#allocation5] sm:$0xff]
    %v121 = vld [vmem:[#allocation5 + $0x8] sm:$0xff]
    %v122 = vld [vmem:[#allocation7] sm:$0xff]
    %v123 = vld [vmem:[#allocation7 + $0x8] sm:$0xff]
    %v124 = vld [vmem:[#allocation8] sm:$0xff]
    %v125 = vld [vmem:[#allocation8 + $0x8] sm:$0xff]
    %v126 = vsub.f32 %v122, %v124
    %v127 = vsub.f32 %v123, %v125
    %v128 = vsub.f32 %v118, %v120
    %v129 = vsub.f32 %v119, %v121
    %v130 = vmul.f32 %v126, %v126
    %v131 = vmul.f32 %v127, %v127
    %v132 = vsub.f32 0.0, %v130
    %v133 = vsub.f32 0.0, %v131
    %v134 = vmul.f32 %v132, 1.442695
    %v135 = vpow.pop %v134
    %v136 = vmul.f32 %v133, 1.442695
    %v137 = vpow.pop %v136
    %v138 = vmul.f32 %v128, %v128
    %v139 = vmul.f32 %v129, %v129
    %v140 = vmul.f32 %v135, %v138
    %v141 = vmul.f32 %v137, %v139
    %v142 = vld [vmem:[#allocation10] sm:$0xff]
    %v143 = vadd.f32 %v140, %v141
    %v144 = vadd.f32 %v142, %v143
    %145 = vst [vmem:[#allocation10] sm:$0xff] %v144
    // Predicated region
    $region38: #{tpu_custom_call.1} parent=1 // pred_check
      _
    $region39: #{tpu_custom_call.1} parent=1 // pred_check_branch
      %147 = sbr.rel (0) target = $region41
    $region40: #{tpu_custom_call.1} parent=1 // pred_region
      %s149 = ssub.s32 128, 128
      %150 = vsyncadd [#allocation4], %s149
      %s152 = sshll.u32 [#allocation10], 4
      %s153 = int_to_ptr.vmem [resolvable:$true] %s152
      %155 = dma.vmem_to_hbm [thread:$0]  %s153, 128, %s4, [#allocation4]
    $region41: #{tpu_custom_call.1} parent=1 // pred_fallthru
      _
    // Predicated region
    $region42: #{tpu_custom_call.1} parent=1 // pred_check
      _
    $region43: #{tpu_custom_call.1} parent=1 // pred_check_branch
      %157 = sbr.rel (0) target = $region45
    $region44: #{tpu_custom_call.1} parent=1 // pred_region
      %158 = dma.done [#allocation4], 128
    $region45: #{tpu_custom_call.1} parent=1 // pred_fallthru
      _
    %159 = vsyncpa [#allocation3], 1
    %160 = vsyncpa [#allocation6], 1
    %161 = vsyncpa [#allocation9], 1
    %162 = vsyncpa [#allocation4], 1

</llo_original>
